<compile_context>
chip_gen: v6e
topology: v6e:2x2x1
jax: 0.10.0
libtpu: 0.0.40
codegen_flags: <defaults>
</compile_context>

<pallas_src>
import jax
import jax.numpy as jnp
from jax import lax
from jax.experimental import pallas as pl
from jax.experimental.pallas import tpu as pltpu

EPS = 1e-6
LANES = 128
MAX_TILE_ROWS = 4096      # (4096,128) f32 block = 2 MiB; 2 in x 2 bufs = 8 MiB VMEM
ACC_ROWS = 32             # width of the resident partial-sum slab


def _make_kernel(tile_rows, rows_valid, needs_mask):
    def kernel(x_ref, y_ref, o_ref):
        j = pl.program_id(0)

        @pl.when(j == 0)
        def _():
            o_ref[...] = jnp.zeros_like(o_ref)

        d = x_ref[...].astype(jnp.float32) - y_ref[...].astype(jnp.float32)
        err = jnp.sqrt(d * d + jnp.float32(EPS))

        def accumulate(e):
            # Fold the (tile_rows, 128) error tile onto the resident slab with
            # independent partial rows (keeps the per-step VPU work short).
            if tile_rows % ACC_ROWS == 0:
                o_ref[...] += e.reshape(tile_rows // ACC_ROWS, ACC_ROWS, LANES).sum(axis=0)
            elif tile_rows % 8 == 0:
                o_ref[0:8, :] += e.reshape(tile_rows // 8, 8, LANES).sum(axis=0)
            else:  # single-block small input; rows < MAX_TILE_ROWS
                o_ref[0:1, :] += e.sum(axis=0, keepdims=True)

        if needs_mask:
            last = pl.num_programs(0) - 1

            @pl.when(j < last)
            def _():
                accumulate(err)

            @pl.when(j == last)
            def _():
                # Only the final (overhanging) block needs masking.
                row = (lax.broadcasted_iota(jnp.int32, (tile_rows, LANES), 0)
                       + j * tile_rows)
                accumulate(jnp.where(row < rows_valid, err, 0.0))
        else:
            accumulate(err)

    return kernel


def l1_charbonnier_loss(x, y):
    assert x.shape == y.shape, "X and Y must have the same shape"
    n = int(x.size)
    if n == 0:
        return jnp.float32(0.0)

    # Keep native dtype (no wrapper upcast: halves HBM traffic for bf16 inputs).
    xf = jnp.ravel(x)
    yf = jnp.ravel(y)

    rows = n // LANES
    tail = n - rows * LANES

    total = jnp.float32(0.0)

    # <=127-element tail handled with plain jnp (no full-array pad copies).
    if tail:
        tx = xf[rows * LANES:].astype(jnp.float32)
        ty = yf[rows * LANES:].astype(jnp.float32)
        td = tx - ty
        total = total + jnp.sum(jnp.sqrt(td * td + jnp.float32(EPS)))

    if rows == 0:
        return total

    x2d = xf[: rows * LANES].reshape(rows, LANES)
    y2d = yf[: rows * LANES].reshape(rows, LANES)

    # Block == full array for small inputs (always tile-legal); big aligned
    # tile otherwise. Grid covers exactly nblocks — no index clamping.
    tile_rows = rows if rows <= MAX_TILE_ROWS else MAX_TILE_ROWS
    nblocks = pl.cdiv(rows, tile_rows)
    needs_mask = (nblocks * tile_rows) != rows

    kernel = _make_kernel(tile_rows, rows, needs_mask)

    partial = pl.pallas_call(
        kernel,
        out_shape=jax.ShapeDtypeStruct((ACC_ROWS, LANES), jnp.float32),
        grid_spec=pltpu.PrefetchScalarGridSpec(
            num_scalar_prefetch=0,
            grid=(nblocks,),
            in_specs=[
                pl.BlockSpec((tile_rows, LANES), lambda j: (j, 0)),
                pl.BlockSpec((tile_rows, LANES), lambda j: (j, 0)),
            ],
            out_specs=pl.BlockSpec((ACC_ROWS, LANES), lambda j: (0, 0)),
        ),
        compiler_params=pltpu.CompilerParams(
            dimension_semantics=("arbitrary",),
            vmem_limit_bytes=32 * 1024 * 1024,   # safe on v5e/v6e/v7x
        ),
        cost_estimate=pl.CostEstimate(
            flops=5 * rows * LANES,
            transcendentals=rows * LANES,
            bytes_accessed=rows * LANES * (x.dtype.itemsize + y.dtype.itemsize)
            + ACC_ROWS * LANES * 4,
        ),
    )(x2d, y2d)

    # Single deferred cross-lane / cross-row reduce of the partial-sum slab.
    return total + jnp.sum(partial)


if __name__ == "__main__":
    key = jax.random.PRNGKey(0)
    kx, ky = jax.random.split(key)
    shape = (2, 4, 16, 16)  # NCHW, as in the PyTorch module
    X = jax.random.normal(kx, shape, dtype=jnp.float32)
    Y = jax.random.normal(ky, shape, dtype=jnp.float32)

    loss = l1_charbonnier_loss(X, Y)
    jax.block_until_ready(loss)

    # Pure-JAX reference check (PyTorch module reduces with sum).
    diff = X - Y
    ref = jnp.sum(jnp.sqrt(diff * diff + EPS))
    assert jnp.allclose(loss, ref, rtol=1e-5, atol=1e-4), (loss, ref)

    print("KERNEL_OK")
</pallas_src>

<mosaic_0001>
module attributes {stable_mosaic.version = 11 : i64} {
  func.func @kernel(%arg0: i32, %arg1: memref<16x128xf32, #tpu.memory_space<vmem>>, %arg2: memref<16x128xf32, #tpu.memory_space<vmem>>, %arg3: memref<32x128xf32, #tpu.memory_space<vmem>>) attributes {dimension_semantics = [#tpu.dimension_semantics<arbitrary>], iteration_bounds = array<i64: 1>, scalar_prefetch = 0 : i64, scratch_operands = 0 : i64, tpu.core_type = #tpu.core_type<tc>, window_params = [{transform_indices = @transform_0, window_bounds = array<i64: 16, 128>}, {transform_indices = @transform_1, window_bounds = array<i64: 16, 128>}, {pipeline_mode = #tpu.pipeline_mode<synchronous>, transform_indices = @transform_2, window_bounds = array<i64: 32, 128>}]} {
    %c0_i32 = arith.constant 0 : i32
    %0 = arith.cmpi eq, %arg0, %c0_i32 : i32
    %1 = arith.extui %0 : i1 to i32
    %c0_i32_0 = arith.constant 0 : i32
    %2 = arith.cmpi ne, %1, %c0_i32_0 : i32
    scf.if %2 {
      %cst_9 = arith.constant 0.000000e+00 : f32
      %15 = vector.broadcast %cst_9 : f32 to vector<32x128xf32>
      %c0_10 = arith.constant 0 : index
      %c0_11 = arith.constant 0 : index
      %16 = vector.load %arg3[%c0_10, %c0_11] : memref<32x128xf32, #tpu.memory_space<vmem>>, vector<32x128xf32>
      tpu.vector_store %arg3[%c0_10, %c0_11], %15 {strides = array<i32>} : memref<32x128xf32, #tpu.memory_space<vmem>>, vector<32x128xf32>,
    } else {
    }
    %c0 = arith.constant 0 : index
    %c0_1 = arith.constant 0 : index
    %3 = vector.load %arg1[%c0, %c0_1] : memref<16x128xf32, #tpu.memory_space<vmem>>, vector<16x128xf32>
    %c0_2 = arith.constant 0 : index
    %c0_3 = arith.constant 0 : index
    %4 = vector.load %arg2[%c0_2, %c0_3] : memref<16x128xf32, #tpu.memory_space<vmem>>, vector<16x128xf32>
    %5 = arith.subf %3, %4 : vector<16x128xf32>
    %6 = arith.mulf %5, %5 : vector<16x128xf32>
    %cst = arith.constant 9.99999997E-7 : f32
    %7 = vector.broadcast %cst : f32 to vector<16x128xf32>
    %8 = arith.addf %6, %7 : vector<16x128xf32>
    %9 = math.sqrt %8 : vector<16x128xf32>
    %c0_4 = arith.constant 0 : index
    %c0_5 = arith.constant 0 : index
    %10 = vector.load %arg3[%c0_4, %c0_5] : memref<32x128xf32, #tpu.memory_space<vmem>>, vector<8x128xf32>
    %11 = vector.shape_cast %9 : vector<16x128xf32> to vector<2x8x128xf32>
    %cst_6 = arith.constant dense<0.000000e+00> : vector<8x128xf32>
    %12 = vector.multi_reduction <add>, %11, %cst_6 [0] : vector<2x8x128xf32> to vector<8x128xf32>
    %13 = arith.addf %10, %12 : vector<8x128xf32>
    %c0_7 = arith.constant 0 : index
    %c0_8 = arith.constant 0 : index
    %14 = vector.load %arg3[%c0_7, %c0_8] : memref<32x128xf32, #tpu.memory_space<vmem>>, vector<8x128xf32>
    tpu.vector_store %arg3[%c0_7, %c0_8], %13 {strides = array<i32>} : memref<32x128xf32, #tpu.memory_space<vmem>>, vector<8x128xf32>,
    return
  }
  func.func @transform_0(%arg0: i32) -> (i32, i32) {
    %c0_i32 = arith.constant 0 : i32
    %c0_i32_0 = arith.constant 0 : i32
    return %arg0, %c0_i32 : i32, i32
  }
  func.func @transform_1(%arg0: i32) -> (i32, i32) {
    %c0_i32 = arith.constant 0 : i32
    %c0_i32_0 = arith.constant 0 : i32
    return %arg0, %c0_i32 : i32, i32
  }
  func.func @transform_2(%arg0: i32) -> (i32, i32) {
    %c0_i32 = arith.constant 0 : i32
    %c0_i32_0 = arith.constant 0 : i32
    %c0_i32_1 = arith.constant 0 : i32
    return %c0_i32, %c0_i32_0 : i32, i32
  }
}

</mosaic_0001>

<llo_original>
// kernel: tpu_custom_call.1
$region0: #{tpu_custom_call.1}
  #allocation0 [shape = 'u32[]', space=smem, size = 0x4, offset = 0x4, fixed_abs, tag = 'smem constant byte address 0x4 - core index']
  #allocation1 [shape = 'u32[144,128]{1,0:T(1,128)}', space=vmem, size = 0x12000, scoped, tag = 'internal scratch']
  %s0 = inlined_call_operand.hbm [shape: f32[16,128], index: 0, kind: input, shape index: {}]
  %s1 = inlined_call_operand.hbm [shape: f32[16,128], index: 1, kind: input, shape index: {}]
  %s2 = inlined_call_operand.hbm [shape: f32[32,128], index: 2, kind: output, shape index: {}]
  %s3 = sld [smem:[#allocation0]]
  $region30: #{tpu_custom_call.1} parent=0
    _
  %s5 = ssub.s32 1, %s3
  %s6 = scalar_select 0, %s5, %s3
  $region1: #{tpu_custom_call.1} parent=0
    #allocation2 [shape = 'u8[8192]{0}', space=vmem, size = 0x2000, scoped, tag = 'input window, operand 0, single buffered']
    #allocation3 [shape = 's32[1]{0}', space=sflag, size = 0x4, scoped, tag = 'scoped memory for tpu_custom_call.1']
    #allocation4 [shape = 's32[1]{0}', space=sflag, size = 0x4, scoped, tag = 'scoped memory for tpu_custom_call.1']
    #allocation5 [shape = 'u8[8192]{0}', space=vmem, size = 0x2000, scoped, tag = 'input window, operand 1, single buffered']
    #allocation6 [shape = 's32[1]{0}', space=sflag, size = 0x4, scoped, tag = 'scoped memory for tpu_custom_call.1']
    #allocation7 [shape = 'u8[16384]{0}', space=vmem, size = 0x4000, scoped, tag = 'output window, operand 0, single buffered']
    %7 = vsyncpa [#allocation3], 0
    %8 = vsyncpa [#allocation6], 0
    %9 = vsyncpa [#allocation4], 0
    // Predicated region
    $region2: #{tpu_custom_call.1} parent=1 // pred_check
      _
    $region3: #{tpu_custom_call.1} parent=1 // pred_check_branch
      %11 = sbr.rel (0) target = $region5
    $region4: #{tpu_custom_call.1} parent=1 // pred_region
      %s13 = ssub.s32 256, 256
      %14 = vsyncadd [#allocation3], %s13
      %s15 = sshll.u32 [#allocation2], 4
      %s16 = int_to_ptr.vmem [resolvable:$true] %s15
      %21 = dma.hbm_to_vmem [thread:$0]  %s0, 256, %s16, [#allocation3], 128, 128, 8
    $region5: #{tpu_custom_call.1} parent=1 // pred_fallthru
      _
    // Predicated region
    $region6: #{tpu_custom_call.1} parent=1 // pred_check
      _
    $region7: #{tpu_custom_call.1} parent=1 // pred_check_branch
      %23 = sbr.rel (0) target = $region9
    $region8: #{tpu_custom_call.1} parent=1 // pred_region
      %s25 = ssub.s32 256, 256
      %26 = vsyncadd [#allocation6], %s25
      %s27 = sshll.u32 [#allocation5], 4
      %s28 = int_to_ptr.vmem [resolvable:$true] %s27
      %33 = dma.hbm_to_vmem [thread:$0]  %s1, 256, %s28, [#allocation6], 128, 128, 8
    $region9: #{tpu_custom_call.1} parent=1 // pred_fallthru
      _
    // Predicated region
    $region10: #{tpu_custom_call.1} parent=1 // pred_check
      _
    $region11: #{tpu_custom_call.1} parent=1 // pred_check_branch
      %35 = sbr.rel (0) target = $region13
    $region12: #{tpu_custom_call.1} parent=1 // pred_region
      %36 = dma.done [#allocation3], 256
    $region13: #{tpu_custom_call.1} parent=1 // pred_fallthru
      _
    // Predicated region
    $region14: #{tpu_custom_call.1} parent=1 // pred_check
      _
    $region15: #{tpu_custom_call.1} parent=1 // pred_check_branch
      %38 = sbr.rel (0) target = $region17
    $region16: #{tpu_custom_call.1} parent=1 // pred_region
      %39 = dma.done [#allocation6], 256
    $region17: #{tpu_custom_call.1} parent=1 // pred_fallthru
      _
    %p40 = scmp.eq.s32.totalorder 0, 0
    // Predicated region
    $region18: #{tpu_custom_call.1} parent=1 // pred_check
      %p41 = pneg %p40
    $region19: #{tpu_custom_call.1} parent=1 // pred_check_branch
      %43 = sbr.rel (%p41) target = $region21
    $region20: #{tpu_custom_call.1} parent=1 // pred_region
      %44 = vst [vmem:[#allocation7] sm:$0xff] 0.0
      %45 = vst [vmem:[#allocation7 + $0x8] sm:$0xff] 0.0
      %46 = vst [vmem:[#allocation7 + $0x10] sm:$0xff] 0.0
      %47 = vst [vmem:[#allocation7 + $0x18] sm:$0xff] 0.0
    $region21: #{tpu_custom_call.1} parent=1 // pred_fallthru
      _
    %v48 = vld [vmem:[#allocation2] sm:$0xff]
    %v49 = vld [vmem:[#allocation2 + $0x8] sm:$0xff]
    %v50 = vld [vmem:[#allocation5] sm:$0xff]
    %v51 = vld [vmem:[#allocation5 + $0x8] sm:$0xff]
    %v52 = vsub.f32 %v48, %v50
    %v53 = vsub.f32 %v49, %v51
    %v54 = vmul.f32 %v52, %v52
    %v55 = vmul.f32 %v53, %v53
    %v56 = vadd.f32 %v54, 1e-06
    %v57 = vadd.f32 %v55, 1e-06
    %v58 = vrsqrt.pop %v56
    %v59 = vmul.f32 %v56, %v58
    %vm60 = vcmp.eq.f32.partialorder %v56, inf
    %v61 = vsel %vm60, %v56, %v59
    %vm62 = vcmp.eq.f32.partialorder %v56, 0.0
    %v63 = vand.u32 %v56, 2147483648
    %v64 = vsel %vm62, %v63, %v61
    %v65 = vrsqrt.pop %v57
    %v66 = vmul.f32 %v57, %v65
    %vm67 = vcmp.eq.f32.partialorder %v57, inf
    %v68 = vsel %vm67, %v57, %v66
    %vm69 = vcmp.eq.f32.partialorder %v57, 0.0
    %v70 = vand.u32 %v57, 2147483648
    %v71 = vsel %vm69, %v70, %v68
    %v72 = vld [vmem:[#allocation7] sm:$0xff]
    %v73 = vadd.f32 %v64, %v71
    %v74 = vadd.f32 %v72, %v73
    %75 = vst [vmem:[#allocation7] sm:$0xff] %v74
    // Predicated region
    $region22: #{tpu_custom_call.1} parent=1 // pred_check
      _
    $region23: #{tpu_custom_call.1} parent=1 // pred_check_branch
      %77 = sbr.rel (0) target = $region25
    $region24: #{tpu_custom_call.1} parent=1 // pred_region
      %s79 = ssub.s32 512, 512
      %80 = vsyncadd [#allocation4], %s79
      %s81 = sshll.u32 [#allocation7], 4
      %s82 = int_to_ptr.vmem [resolvable:$true] %s81
      %87 = dma.vmem_to_hbm [thread:$0]  %s82, 512, %s2, [#allocation4], 128, 128, 8
    $region25: #{tpu_custom_call.1} parent=1 // pred_fallthru
      _
    // Predicated region
    $region26: #{tpu_custom_call.1} parent=1 // pred_check
      _
    $region27: #{tpu_custom_call.1} parent=1 // pred_check_branch
      %89 = sbr.rel (0) target = $region29
    $region28: #{tpu_custom_call.1} parent=1 // pred_region
      %90 = dma.done [#allocation4], 512
    $region29: #{tpu_custom_call.1} parent=1 // pred_fallthru
      _
    %91 = vsyncpa [#allocation3], 1
    %92 = vsyncpa [#allocation6], 1
    %93 = vsyncpa [#allocation4], 1

</llo_original>
